<compile_context>
chip_gen: v7x
topology: tpu7x:2x2x1
jax: 0.10.0
libtpu: 0.0.40
codegen_flags: <defaults>
</compile_context>

<pallas_src>
import functools

import jax
import jax.numpy as jnp
from jax.experimental import pallas as pl
from jax.experimental.pallas import tpu as pltpu

LAYER_SIZES = [1, 50, 40, 30, 20, 10, 1]   # matches the PyTorch module
_NUM_LAYERS = len(LAYER_SIZES) - 1


def _round8(v):
    return ((v + 7) // 8) * 8


# ---------------------------------------------------------------------------
# Static layout of the packed parameter slab (PARAM_ROWS x 128 lanes, f32):
#   * hidden-layer weights W_l (out, in) at rows [_W_OFFS[l] : +out], cols [0:in]
#   * output-layer weight stored transposed (in, 1) at col 0 (so the kernel can
#     broadcast it against (in, batch) without a lane->sublane reshape)
#   * every bias stored as an (out, 1) column at col 0, after the weights
# Row offsets are 8-aligned (sublane groups) and every column start is 0, so
# all in-kernel slices are layout-friendly static views.
# ---------------------------------------------------------------------------
_W_OFFS = []
_row = 0
for _l in range(_NUM_LAYERS):
    _out_f, _in_f = LAYER_SIZES[_l + 1], LAYER_SIZES[_l]
    _W_OFFS.append(_row)
    _rows = _out_f if _l < _NUM_LAYERS - 1 else _in_f   # last layer stored W^T
    _row = _round8(_row + _rows)
_B_OFFS = []
for _l in range(_NUM_LAYERS):
    _B_OFFS.append(_row)
    _row = _round8(_row + LAYER_SIZES[_l + 1])
PARAM_ROWS = _row          # 360
PARAM_COLS = 128           # full lane width -> unmasked loads of the slab


def pinn_kernel(x_ref, p_ref, o_ref):
    # x_ref: (1, tm) block -- batch on lanes, features on sublanes throughout.
    x = x_ref[...]

    def sigmoid(h):
        # single EUP tanh instead of exp + reciprocal
        return 0.5 * (jnp.tanh(0.5 * h) + 1.0)

    # ---- Layer 1 (in_features == 1): VPU broadcast multiply-add, no MXU pass.
    out0 = LAYER_SIZES[1]
    w1 = p_ref[_W_OFFS[0]:_W_OFFS[0] + out0, 0:1]        # (50, 1)
    b1 = p_ref[_B_OFFS[0]:_B_OFFS[0] + out0, 0:1]        # (50, 1)
    h = sigmoid(w1 * x + b1)                             # (50, tm)

    # ---- Hidden layers 2..5: (out, in) @ (in, tm) on the MXU, f32 accumulate.
    for l in range(1, _NUM_LAYERS - 1):
        out_f, in_f = LAYER_SIZES[l + 1], LAYER_SIZES[l]
        w = p_ref[_W_OFFS[l]:_W_OFFS[l] + out_f, 0:in_f]   # (out, in)
        b = p_ref[_B_OFFS[l]:_B_OFFS[l] + out_f, 0:1]      # (out, 1)
        h = sigmoid(jnp.dot(w, h, preferred_element_type=jnp.float32) + b)

    # ---- Output layer (out_features == 1): weighted sum over 10 features on
    # the VPU/XLU; result stays lane-dense (1, tm) for the unmasked store.
    in_last = LAYER_SIZES[-2]
    w6t = p_ref[_W_OFFS[-1]:_W_OFFS[-1] + in_last, 0:1]    # (10, 1) == W6^T
    b6 = p_ref[_B_OFFS[-1]:_B_OFFS[-1] + 1, 0:1]           # (1, 1)
    out = jnp.sum(w6t * h, axis=0, keepdims=True) + b6     # (1, tm)
    o_ref[...] = out.astype(o_ref.dtype)


def init_params(key):
    """PyTorch-layout params: W (out, in), b (out,), nn.Linear default init."""
    params = []
    for i in range(_NUM_LAYERS):
        fan_in, fan_out = LAYER_SIZES[i], LAYER_SIZES[i + 1]
        key, kw, kb = jax.random.split(key, 3)
        bound = 1.0 / (fan_in ** 0.5)
        w = jax.random.uniform(kw, (fan_out, fan_in), jnp.float32, -bound, bound)
        b = jax.random.uniform(kb, (fan_out,), jnp.float32, -bound, bound)
        params.append((w, b))
    return params


def pack_params(params):
    """Pack all weights + biases into one (PARAM_ROWS, 128) f32 slab."""
    slab = jnp.zeros((PARAM_ROWS, PARAM_COLS), jnp.float32)
    for l, (w, b) in enumerate(params):
        out_f, in_f = w.shape
        if l < _NUM_LAYERS - 1:
            slab = slab.at[_W_OFFS[l]:_W_OFFS[l] + out_f, 0:in_f].set(w)
        else:
            slab = slab.at[_W_OFFS[l]:_W_OFFS[l] + in_f, 0:1].set(w.T)
        slab = slab.at[_B_OFFS[l]:_B_OFFS[l] + out_f, 0:1].set(b.reshape(out_f, 1))
    return slab


@functools.partial(jax.jit, static_argnames=("tm",))
def pinn_forward(x, params, *, tm=256):
    """x: (N, 1) float32.  Returns (N, 1) float32 = PINN.forward(x).

    tm: batch tile on the lane axis. Must be a multiple of 128; 256-multiples
    fill the MXU columns on v6e/v7x. N is padded up to a multiple of tm.
    """
    assert tm % 128 == 0, "tm must be a multiple of 128 (lane width)"
    n = x.shape[0]
    n_pad = ((n + tm - 1) // tm) * tm

    # Transposed, lane-dense I/O: (N, 1) -> (1, N_pad)
    xt = x.astype(jnp.float32).reshape(1, n)
    if n_pad != n:
        xt = jnp.pad(xt, ((0, 0), (0, n_pad - n)))

    slab = pack_params(params)
    grid = (n_pad // tm,)

    out = pl.pallas_call(
        pinn_kernel,
        out_shape=jax.ShapeDtypeStruct((1, n_pad), jnp.float32),
        grid_spec=pltpu.PrefetchScalarGridSpec(
            num_scalar_prefetch=0,
            grid=grid,
            in_specs=[
                pl.BlockSpec((1, tm), lambda i: (0, i)),                   # x slab
                pl.BlockSpec((PARAM_ROWS, PARAM_COLS), lambda i: (0, 0)),  # params
            ],
            out_specs=pl.BlockSpec((1, tm), lambda i: (0, i)),
        ),
        compiler_params=pltpu.CompilerParams(
            dimension_semantics=("parallel",)),
    )(xt, slab)

    return out[0, :n].reshape(n, 1)


def pinn_forward_ref(x, params):
    """Plain-JAX reference (PyTorch semantics: y = x @ W.T + b, sigmoid hidden)."""
    h = x
    for idx, (w, b) in enumerate(params):
        h = h @ w.T + b
        if idx < len(params) - 1:
            h = jax.nn.sigmoid(h)
    return h


if __name__ == "__main__":
    key = jax.random.PRNGKey(0)
    key, kx = jax.random.split(key)

    params = init_params(key)

    # 1-D coordinate input of the PINN: shape (batch, 1).
    # 500 collocation points (same as the training script); padded to 512 so
    # with tm=256 there are 2 grid tiles (both v7x TensorCores get work).
    batch = 500
    x = jax.random.uniform(kx, (batch, 1), jnp.float32, -5.0, 5.0)

    y = pinn_forward(x, params, tm=256)
    y = jax.block_until_ready(y)

    y_ref = pinn_forward_ref(x, params)
    assert y.shape == (batch, 1)
    # tanh-form sigmoid introduces only ulp-level differences vs jax.nn.sigmoid
    assert jnp.allclose(y, y_ref, atol=1e-4, rtol=1e-4), "mismatch vs reference"

    print("KERNEL_OK")
</pallas_src>

<mosaic_0001>
module attributes {stable_mosaic.version = 11 : i64} {
  func.func @pinn_kernel(%arg0: i32, %arg1: memref<1x256xf32, #tpu.memory_space<vmem>>, %arg2: memref<360x128xf32, #tpu.memory_space<vmem>>, %arg3: memref<1x256xf32, #tpu.memory_space<vmem>>) attributes {dimension_semantics = [#tpu.dimension_semantics<parallel>], iteration_bounds = array<i64: 2>, scalar_prefetch = 0 : i64, scratch_operands = 0 : i64, tpu.core_type = #tpu.core_type<tc>, window_params = [{transform_indices = @transform_0, window_bounds = array<i64: 1, 256>}, {pipeline_mode = #tpu.pipeline_mode<synchronous>, transform_indices = @transform_1, window_bounds = array<i64: 360, 128>}, {transform_indices = @transform_2, window_bounds = array<i64: 1, 256>}]} {
    %c0 = arith.constant 0 : index
    %c0_0 = arith.constant 0 : index
    %0 = vector.load %arg1[%c0, %c0_0] : memref<1x256xf32, #tpu.memory_space<vmem>>, vector<1x256xf32>
    %c0_1 = arith.constant 0 : index
    %c0_2 = arith.constant 0 : index
    %1 = vector.load %arg2[%c0_1, %c0_2] : memref<360x128xf32, #tpu.memory_space<vmem>>, vector<50x1xf32>
    %c184 = arith.constant 184 : index
    %c0_3 = arith.constant 0 : index
    %2 = vector.load %arg2[%c184, %c0_3] : memref<360x128xf32, #tpu.memory_space<vmem>>, vector<50x1xf32>
    %3 = vector.broadcast %1 : vector<50x1xf32> to vector<50x256xf32>
    %4 = vector.broadcast %0 : vector<1x256xf32> to vector<50x256xf32>
    %5 = arith.mulf %3, %4 : vector<50x256xf32>
    %6 = vector.broadcast %2 : vector<50x1xf32> to vector<50x256xf32>
    %7 = arith.addf %5, %6 : vector<50x256xf32>
    %cst = arith.constant 5.000000e-01 : f32
    %8 = vector.broadcast %cst : f32 to vector<50x256xf32>
    %9 = arith.mulf %8, %7 : vector<50x256xf32>
    %10 = math.tanh %9 : vector<50x256xf32>
    %cst_4 = arith.constant 1.000000e+00 : f32
    %11 = vector.broadcast %cst_4 : f32 to vector<50x256xf32>
    %12 = arith.addf %10, %11 : vector<50x256xf32>
    %cst_5 = arith.constant 5.000000e-01 : f32
    %13 = vector.broadcast %cst_5 : f32 to vector<50x256xf32>
    %14 = arith.mulf %13, %12 : vector<50x256xf32>
    %c56 = arith.constant 56 : index
    %c0_6 = arith.constant 0 : index
    %15 = vector.load %arg2[%c56, %c0_6] : memref<360x128xf32, #tpu.memory_space<vmem>>, vector<40x50xf32>
    %c240 = arith.constant 240 : index
    %c0_7 = arith.constant 0 : index
    %16 = vector.load %arg2[%c240, %c0_7] : memref<360x128xf32, #tpu.memory_space<vmem>>, vector<40x1xf32>
    %cst_8 = arith.constant dense<0.000000e+00> : vector<40x256xf32>
    %17 = tpu.matmul %15, %14, %cst_8 {dimension_numbers = #tpu.dot_dimension_numbers<[1], [0], [0], [1], [0, 0, 1, 1], [], []>} : vector<40x50xf32>, vector<50x256xf32>, vector<40x256xf32> -> vector<40x256xf32>
    %18 = vector.broadcast %16 : vector<40x1xf32> to vector<40x256xf32>
    %19 = arith.addf %17, %18 : vector<40x256xf32>
    %cst_9 = arith.constant 5.000000e-01 : f32
    %20 = vector.broadcast %cst_9 : f32 to vector<40x256xf32>
    %21 = arith.mulf %20, %19 : vector<40x256xf32>
    %22 = math.tanh %21 : vector<40x256xf32>
    %cst_10 = arith.constant 1.000000e+00 : f32
    %23 = vector.broadcast %cst_10 : f32 to vector<40x256xf32>
    %24 = arith.addf %22, %23 : vector<40x256xf32>
    %cst_11 = arith.constant 5.000000e-01 : f32
    %25 = vector.broadcast %cst_11 : f32 to vector<40x256xf32>
    %26 = arith.mulf %25, %24 : vector<40x256xf32>
    %c96 = arith.constant 96 : index
    %c0_12 = arith.constant 0 : index
    %27 = vector.load %arg2[%c96, %c0_12] : memref<360x128xf32, #tpu.memory_space<vmem>>, vector<30x40xf32>
    %c280 = arith.constant 280 : index
    %c0_13 = arith.constant 0 : index
    %28 = vector.load %arg2[%c280, %c0_13] : memref<360x128xf32, #tpu.memory_space<vmem>>, vector<30x1xf32>
    %cst_14 = arith.constant dense<0.000000e+00> : vector<30x256xf32>
    %29 = tpu.matmul %27, %26, %cst_14 {dimension_numbers = #tpu.dot_dimension_numbers<[1], [0], [0], [1], [0, 0, 1, 1], [], []>} : vector<30x40xf32>, vector<40x256xf32>, vector<30x256xf32> -> vector<30x256xf32>
    %30 = vector.broadcast %28 : vector<30x1xf32> to vector<30x256xf32>
    %31 = arith.addf %29, %30 : vector<30x256xf32>
    %cst_15 = arith.constant 5.000000e-01 : f32
    %32 = vector.broadcast %cst_15 : f32 to vector<30x256xf32>
    %33 = arith.mulf %32, %31 : vector<30x256xf32>
    %34 = math.tanh %33 : vector<30x256xf32>
    %cst_16 = arith.constant 1.000000e+00 : f32
    %35 = vector.broadcast %cst_16 : f32 to vector<30x256xf32>
    %36 = arith.addf %34, %35 : vector<30x256xf32>
    %cst_17 = arith.constant 5.000000e-01 : f32
    %37 = vector.broadcast %cst_17 : f32 to vector<30x256xf32>
    %38 = arith.mulf %37, %36 : vector<30x256xf32>
    %c128 = arith.constant 128 : index
    %c0_18 = arith.constant 0 : index
    %39 = vector.load %arg2[%c128, %c0_18] : memref<360x128xf32, #tpu.memory_space<vmem>>, vector<20x30xf32>
    %c312 = arith.constant 312 : index
    %c0_19 = arith.constant 0 : index
    %40 = vector.load %arg2[%c312, %c0_19] : memref<360x128xf32, #tpu.memory_space<vmem>>, vector<20x1xf32>
    %cst_20 = arith.constant dense<0.000000e+00> : vector<20x256xf32>
    %41 = tpu.matmul %39, %38, %cst_20 {dimension_numbers = #tpu.dot_dimension_numbers<[1], [0], [0], [1], [0, 0, 1, 1], [], []>} : vector<20x30xf32>, vector<30x256xf32>, vector<20x256xf32> -> vector<20x256xf32>
    %42 = vector.broadcast %40 : vector<20x1xf32> to vector<20x256xf32>
    %43 = arith.addf %41, %42 : vector<20x256xf32>
    %cst_21 = arith.constant 5.000000e-01 : f32
    %44 = vector.broadcast %cst_21 : f32 to vector<20x256xf32>
    %45 = arith.mulf %44, %43 : vector<20x256xf32>
    %46 = math.tanh %45 : vector<20x256xf32>
    %cst_22 = arith.constant 1.000000e+00 : f32
    %47 = vector.broadcast %cst_22 : f32 to vector<20x256xf32>
    %48 = arith.addf %46, %47 : vector<20x256xf32>
    %cst_23 = arith.constant 5.000000e-01 : f32
    %49 = vector.broadcast %cst_23 : f32 to vector<20x256xf32>
    %50 = arith.mulf %49, %48 : vector<20x256xf32>
    %c152 = arith.constant 152 : index
    %c0_24 = arith.constant 0 : index
    %51 = vector.load %arg2[%c152, %c0_24] : memref<360x128xf32, #tpu.memory_space<vmem>>, vector<10x20xf32>
    %c336 = arith.constant 336 : index
    %c0_25 = arith.constant 0 : index
    %52 = vector.load %arg2[%c336, %c0_25] : memref<360x128xf32, #tpu.memory_space<vmem>>, vector<10x1xf32>
    %cst_26 = arith.constant dense<0.000000e+00> : vector<10x256xf32>
    %53 = tpu.matmul %51, %50, %cst_26 {dimension_numbers = #tpu.dot_dimension_numbers<[1], [0], [0], [1], [0, 0, 1, 1], [], []>} : vector<10x20xf32>, vector<20x256xf32>, vector<10x256xf32> -> vector<10x256xf32>
    %54 = vector.broadcast %52 : vector<10x1xf32> to vector<10x256xf32>
    %55 = arith.addf %53, %54 : vector<10x256xf32>
    %cst_27 = arith.constant 5.000000e-01 : f32
    %56 = vector.broadcast %cst_27 : f32 to vector<10x256xf32>
    %57 = arith.mulf %56, %55 : vector<10x256xf32>
    %58 = math.tanh %57 : vector<10x256xf32>
    %cst_28 = arith.constant 1.000000e+00 : f32
    %59 = vector.broadcast %cst_28 : f32 to vector<10x256xf32>
    %60 = arith.addf %58, %59 : vector<10x256xf32>
    %cst_29 = arith.constant 5.000000e-01 : f32
    %61 = vector.broadcast %cst_29 : f32 to vector<10x256xf32>
    %62 = arith.mulf %61, %60 : vector<10x256xf32>
    %c168 = arith.constant 168 : index
    %c0_30 = arith.constant 0 : index
    %63 = vector.load %arg2[%c168, %c0_30] : memref<360x128xf32, #tpu.memory_space<vmem>>, vector<10x1xf32>
    %c352 = arith.constant 352 : index
    %c0_31 = arith.constant 0 : index
    %64 = vector.load %arg2[%c352, %c0_31] : memref<360x128xf32, #tpu.memory_space<vmem>>, vector<1x1xf32>
    %65 = vector.broadcast %63 : vector<10x1xf32> to vector<10x256xf32>
    %66 = arith.mulf %65, %62 : vector<10x256xf32>
    %cst_32 = arith.constant dense<0.000000e+00> : vector<256xf32>
    %67 = vector.multi_reduction <add>, %66, %cst_32 [0] : vector<10x256xf32> to vector<256xf32>
    %68 = vector.shape_cast %67 : vector<256xf32> to vector<1x256xf32>
    %69 = vector.broadcast %64 : vector<1x1xf32> to vector<1x256xf32>
    %70 = arith.addf %68, %69 : vector<1x256xf32>
    %c0_33 = arith.constant 0 : index
    %c0_34 = arith.constant 0 : index
    %71 = vector.load %arg3[%c0_33, %c0_34] : memref<1x256xf32, #tpu.memory_space<vmem>>, vector<1x256xf32>
    tpu.vector_store %arg3[%c0_33, %c0_34], %70 {strides = array<i32>} : memref<1x256xf32, #tpu.memory_space<vmem>>, vector<1x256xf32>,
    return
  }
  func.func @transform_0(%arg0: i32) -> (i32, i32) {
    %c0_i32 = arith.constant 0 : i32
    %c0_i32_0 = arith.constant 0 : i32
    return %c0_i32, %arg0 : i32, i32
  }
  func.func @transform_1(%arg0: i32) -> (i32, i32) {
    %c0_i32 = arith.constant 0 : i32
    %c0_i32_0 = arith.constant 0 : i32
    %c0_i32_1 = arith.constant 0 : i32
    return %c0_i32, %c0_i32_0 : i32, i32
  }
  func.func @transform_2(%arg0: i32) -> (i32, i32) {
    %c0_i32 = arith.constant 0 : i32
    %c0_i32_0 = arith.constant 0 : i32
    return %c0_i32, %arg0 : i32, i32
  }
}

</mosaic_0001>

<llo_original>
// kernel: pinn_forward.1
$region0: #{pinn_forward.1}
  #allocation0 [shape = 'u32[]', space=smem, size = 0x4, offset = 0x4, fixed_abs, tag = 'smem constant byte address 0x4 - core index']
  #allocation1 [shape = 'u32[144,128]{1,0:T(1,128)}', space=vmem, size = 0x12000, scoped, tag = 'internal scratch']
  %s0 = inlined_call_operand.vmem [shape: f32[1,512], index: 0, kind: input, shape index: {}]
  %s1 = inlined_call_operand.vmem [shape: f32[360,128], index: 1, kind: input, shape index: {}]
  %s2 = inlined_call_operand.vmem [shape: f32[1,512], index: 2, kind: output, shape index: {}]
  %s3 = sld [smem:[#allocation0]]
  $region41: #{pinn_forward.1} parent=0
    _
  %s5 = ssub.s32 1, %s3
  %s6 = scalar_select 0, %s5, %s3
  loop: start=0, step=1, limit=4
  $region2: #{pinn_forward.1} parent=0 // loop_pre_header
    _
  $region3: #{pinn_forward.1} parent=0 // loop_header
    %s8 = sphi 0, %s12
    %p9 = scmp.ge.s32.totalorder %s8, 4
    %s18 = sphi 0, %s20
    %s21 = sphi 0, %s18
    %s22 = sphi 0, %s21
    %s38 = sphi 0, %s22
    %s42 = sphi 0, %s42
    %s44 = sphi 0, %s42
    %s45 = sphi 0, %s44
    %s59 = sphi 0, %s45
    %s65 = sphi 0, %s67
    %s68 = sphi 0, %s65
    %s69 = sphi 0, %s68
    %s85 = sphi 0, %s69
  $region4: #{pinn_forward.1} parent=0 // loop_header_branch
    %11 = sbr.rel (%p9) target = $region8
  $region5: #{pinn_forward.1} parent=0 // loop_body
    %s13 = ssub.s32 %s8, 1
    %s14 = ssub.s32 %s8, 2
    %s15 = sadd.s32 %s8, 1
    %s16 = ssub.s32 %s8, %s15
    %p17 = scmp.eq.s32.totalorder %s16, 0
    %s19 = sadd.s32 %s18, 1
    %s20 = scalar_select %p17, %s18, %s19
    %p23 = pneg %p17
    %p24 = scmp.eq.s32.totalorder %s8, 1
    %p25 = por %p23, %p24
    %p26 = scmp.ne.s32.totalorder %s18, %s21
    %p27 = scmp.eq.s32.totalorder %s8, 0
    %p28 = por %p26, %p27
    %p29 = scmp.ne.s32.totalorder %s18, %s21
    %p30 = scmp.eq.s32.totalorder %s13, 1
    %p31 = por %p29, %p30
    %p32 = scmp.ne.s32.totalorder %s21, %s22
    %p33 = scmp.eq.s32.totalorder %s13, 0
    %p34 = por %p32, %p33
    %p35 = scmp.ne.s32.totalorder %s21, %s22
    %p36 = scmp.eq.s32.totalorder %s14, 1
    %p37 = por %p35, %p36
    %p39 = scmp.ne.s32.totalorder %s22, %s38
    %p40 = scmp.eq.s32.totalorder %s14, 0
    %p41 = por %p39, %p40
    %s43 = sadd.s32 %s42, 1
    %p46 = scmp.eq.s32.totalorder %s8, 1
    %p47 = scmp.ne.s32.totalorder %s42, %s44
    %p48 = scmp.eq.s32.totalorder %s8, 0
    %p49 = por %p47, %p48
    %p50 = scmp.ne.s32.totalorder %s42, %s44
    %p51 = scmp.eq.s32.totalorder %s13, 1
    %p52 = por %p50, %p51
    %p53 = scmp.ne.s32.totalorder %s44, %s45
    %p54 = scmp.eq.s32.totalorder %s13, 0
    %p55 = por %p53, %p54
    %p56 = scmp.ne.s32.totalorder %s44, %s45
    %p57 = scmp.eq.s32.totalorder %s14, 1
    %p58 = por %p56, %p57
    %p60 = scmp.ne.s32.totalorder %s45, %s59
    %p61 = scmp.eq.s32.totalorder %s14, 0
    %p62 = por %p60, %p61
    %s63 = ssub.s32 %s8, %s15
    %p64 = scmp.eq.s32.totalorder %s63, 0
    %s66 = sadd.s32 %s65, 1
    %s67 = scalar_select %p64, %s65, %s66
    %p70 = pneg %p64
    %p71 = scmp.eq.s32.totalorder %s8, 1
    %p72 = por %p70, %p71
    %p73 = scmp.ne.s32.totalorder %s65, %s68
    %p74 = scmp.eq.s32.totalorder %s8, 0
    %p75 = por %p73, %p74
    %p76 = scmp.ne.s32.totalorder %s65, %s68
    %p77 = scmp.eq.s32.totalorder %s13, 1
    %p78 = por %p76, %p77
    %p79 = scmp.ne.s32.totalorder %s68, %s69
    %p80 = scmp.eq.s32.totalorder %s13, 0
    %p81 = por %p79, %p80
    %p82 = scmp.ne.s32.totalorder %s68, %s69
    %p83 = scmp.eq.s32.totalorder %s14, 1
    %p84 = por %p82, %p83
    %p86 = scmp.ne.s32.totalorder %s69, %s85
    %p87 = scmp.eq.s32.totalorder %s14, 0
    %p88 = por %p86, %p87
    %p89 = scmp.le.s32.totalorder 1, %s8
    %p90 = scmp.lt.s32.totalorder %s8, 3
    %p91 = pnand %p89, %p90
    %p92 = pneg %p91
    // Predicated region
    $region9: #{pinn_forward.1} parent=5 // pred_check
      _
    $region10: #{pinn_forward.1} parent=5 // pred_check_branch
      %94 = sbr.rel (%p91) target = $region12
    $region11: #{pinn_forward.1} parent=5 // pred_region
      %s95 = ssub.s32 %s8, 1
      // Predicated region
      $region13: #{pinn_forward.1} parent=11 // pred_check
        %p96 = pneg %p55
      $region14: #{pinn_forward.1} parent=11 // pred_check_branch
        %98 = sbr.rel (%p96) target = $region16
      $region15: #{pinn_forward.1} parent=11 // pred_region
        _
      $region16: #{pinn_forward.1} parent=11 // pred_fallthru
        _
    $region12: #{pinn_forward.1} parent=5 // pred_fallthru
      _
    %p99 = scmp.lt.s32.totalorder %s8, 2
    // Predicated region
    $region17: #{pinn_forward.1} parent=5 // pred_check
      %p100 = pneg %p99
    $region18: #{pinn_forward.1} parent=5 // pred_check_branch
      %102 = sbr.rel (%p100) target = $region20
    $region19: #{pinn_forward.1} parent=5 // pred_region
      // Predicated region
      $region21: #{pinn_forward.1} parent=19 // pred_check
        %p103 = pneg %p28
      $region22: #{pinn_forward.1} parent=19 // pred_check_branch
        %105 = sbr.rel (%p103) target = $region24
      $region23: #{pinn_forward.1} parent=19 // pred_region
        %s106 = smul.u32 2, %s8
        %p107 = scmp.lt.s32.totalorder %s106, 3
        %s108 = scalar_select %p107, %s106, 3
        %s109 = scalar_lea.vmem %s0, %s108
        %s110 = smul.u32 2, %s8
      $region24: #{pinn_forward.1} parent=19 // pred_fallthru
        _
    $region20: #{pinn_forward.1} parent=5 // pred_fallthru
      _
    %p111 = scmp.le.s32.totalorder 1, %s8
    %p112 = scmp.lt.s32.totalorder %s8, 3
    %p113 = pnand %p111, %p112
    %p114 = pneg %p113
    // Predicated region
    $region25: #{pinn_forward.1} parent=5 // pred_check
      _
    $region26: #{pinn_forward.1} parent=5 // pred_check_branch
      %116 = sbr.rel (%p113) target = $region28
    $region27: #{pinn_forward.1} parent=5 // pred_region
      %s117 = ssub.s32 %s8, 1
      %s118 = smul.u32 2, %s13
      %p119 = scmp.lt.s32.totalorder %s118, 3
      %s120 = scalar_select %p119, %s118, 3
      %s121 = scalar_lea.vmem %s0, %s120
      %p122 = pneg %p34
      %p123 = pneg %p31
      %p124 = pneg %p55
      %p125 = pneg %p52
      %p126 = pneg %p81
      %p127 = pneg %p78
      %s128 = smul.u32 2, %s13
      %p129 = scmp.lt.s32.totalorder %s128, 3
      %s130 = scalar_select %p129, %s128, 3
      %s131 = scalar_lea.vmem %s2, %s130
      %s132 = smul.u32 2, %s13
      %p133 = scmp.lt.s32.totalorder %s132, 3
      %s134 = scalar_select %p133, %s132, 3
      %s135 = scalar_lea.vmem %s0, %s134
      %s136 = smul.u32 2, %s13
      %s137 = smul.u32 2, %s13
      %p138 = scmp.lt.s32.totalorder %s137, 3
      %s139 = scalar_select %p138, %s137, 3
      %s140 = scalar_lea.vmem %s2, %s139
      %s141 = smul.u32 2, %s13
      %v142 = vld [vmem:[%s135] sm:$0x3]
      %v143 = vld [vmem:[%s1] sm:$0xff]
      %v144 = vld [vmem:[%s1 + $0x8] sm:$0xff]
      %v145 = vld [vmem:[%s1 + $0x10] sm:$0xff]
      %v146 = vld [vmem:[%s1 + $0x18] sm:$0xff]
      %v147 = vld [vmem:[%s1 + $0x20] sm:$0xff]
      %v148 = vld [vmem:[%s1 + $0x28] sm:$0xff]
      %v149 = vld [vmem:[%s1 + $0x30] sm:$0x3]
      %v150 = vld [vmem:[%s1 + $0xb8] sm:$0xff]
      %v151 = vld [vmem:[%s1 + $0xc0] sm:$0xff]
      %v152 = vld [vmem:[%s1 + $0xc8] sm:$0xff]
      %v153 = vld [vmem:[%s1 + $0xd0] sm:$0xff]
      %v154 = vld [vmem:[%s1 + $0xd8] sm:$0xff]
      %v155 = vld [vmem:[%s1 + $0xe0] sm:$0xff]
      %v156 = vld [vmem:[%s1 + $0xe8] sm:$0x3]
      %158 = vset.pattern.permute.xlu0 0
      %159 = vperm.xlu0 %158, %v143
      %v160 = vpop.permute.xlu0 %159
      %163 = vset.pattern.permute.xlu0 0
      %164 = vperm.xlu0 %163, %v144
      %v165 = vpop.permute.xlu0 %164
      %168 = vset.pattern.permute.xlu0 0
      %169 = vperm.xlu0 %168, %v145
      %v170 = vpop.permute.xlu0 %169
      %173 = vset.pattern.permute.xlu0 0
      %174 = vperm.xlu0 %173, %v146
      %v175 = vpop.permute.xlu0 %174
      %178 = vset.pattern.permute.xlu0 0
      %179 = vperm.xlu0 %178, %v147
      %v180 = vpop.permute.xlu0 %179
      %183 = vset.pattern.permute.xlu0 0
      %184 = vperm.xlu0 %183, %v148
      %v185 = vpop.permute.xlu0 %184
      %188 = vset.pattern.permute.xlu0 0
      %189 = vperm.xlu0 %188, %v149
      %v190 = vpop.permute.xlu0 %189
      %v193 = vlaneseq
      %v194 = vshrl.u32 %v193, 7
      %v195 = vsub.s32 0, %v194
      %v196 = vrot.slane %v142, %v195
      %v197 = vlaneseq
      %v198 = vshrl.u32 %v197, 7
      %v199 = vsub.s32 1, %v198
      %v200 = vrot.slane %v142, %v199
      %v203 = vmul.f32 %v160, %v196
      %v204 = vmul.f32 %v160, %v200
      %v205 = vmul.f32 %v165, %v196
      %v206 = vmul.f32 %v165, %v200
      %v207 = vmul.f32 %v170, %v196
      %v208 = vmul.f32 %v170, %v200
      %v209 = vmul.f32 %v175, %v196
      %v210 = vmul.f32 %v175, %v200
      %v211 = vmul.f32 %v180, %v196
      %v212 = vmul.f32 %v180, %v200
      %v213 = vmul.f32 %v185, %v196
      %v214 = vmul.f32 %v185, %v200
      %v215 = vmul.f32 %v190, %v196
      %v216 = vmul.f32 %v190, %v200
      %218 = vset.pattern.permute.xlu0 0
      %219 = vperm.xlu0 %218, %v150
      %v220 = vpop.permute.xlu0 %219
      %223 = vset.pattern.permute.xlu0 0
      %224 = vperm.xlu0 %223, %v151
      %v225 = vpop.permute.xlu0 %224
      %228 = vset.pattern.permute.xlu0 0
      %229 = vperm.xlu0 %228, %v152
      %v230 = vpop.permute.xlu0 %229
      %233 = vset.pattern.permute.xlu0 0
      %234 = vperm.xlu0 %233, %v153
      %v235 = vpop.permute.xlu0 %234
      %238 = vset.pattern.permute.xlu0 0
      %239 = vperm.xlu0 %238, %v154
      %v240 = vpop.permute.xlu0 %239
      %243 = vset.pattern.permute.xlu0 0
      %244 = vperm.xlu0 %243, %v155
      %v245 = vpop.permute.xlu0 %244
      %248 = vset.pattern.permute.xlu0 0
      %249 = vperm.xlu0 %248, %v156
      %v250 = vpop.permute.xlu0 %249
      %v252 = vadd.f32 %v203, %v220
      %v253 = vadd.f32 %v204, %v220
      %v254 = vadd.f32 %v205, %v225
      %v255 = vadd.f32 %v206, %v225
      %v256 = vadd.f32 %v207, %v230
      %v257 = vadd.f32 %v208, %v230
      %v258 = vadd.f32 %v209, %v235
      %v259 = vadd.f32 %v210, %v235
      %v260 = vadd.f32 %v211, %v240
      %v261 = vadd.f32 %v212, %v240
      %v262 = vadd.f32 %v213, %v245
      %v263 = vadd.f32 %v214, %v245
      %v264 = vadd.f32 %v215, %v250
      %v265 = vadd.f32 %v216, %v250
      %v266 = vmul.f32 %v252, 0.5
      %v267 = vmul.f32 %v253, 0.5
      %v268 = vmul.f32 %v254, 0.5
      %v269 = vmul.f32 %v255, 0.5
      %v270 = vmul.f32 %v256, 0.5
      %v271 = vmul.f32 %v257, 0.5
      %v272 = vmul.f32 %v258, 0.5
      %v273 = vmul.f32 %v259, 0.5
      %v274 = vmul.f32 %v260, 0.5
      %v275 = vmul.f32 %v261, 0.5
      %v276 = vmul.f32 %v262, 0.5
      %v277 = vmul.f32 %v263, 0.5
      %v278 = vmul.f32 %v264, 0.5
      %v279 = vmul.f32 %v265, 0.5
      %v280 = vtanh.pop %v266
      %v281 = vtanh.pop %v267
      %v282 = vtanh.pop %v268
      %v283 = vtanh.pop %v269
      %v284 = vtanh.pop %v270
      %v285 = vtanh.pop %v271
      %v286 = vtanh.pop %v272
      %v287 = vtanh.pop %v273
      %v288 = vtanh.pop %v274
      %v289 = vtanh.pop %v275
      %v290 = vtanh.pop %v276
      %v291 = vtanh.pop %v277
      %v292 = vtanh.pop %v278
      %v293 = vtanh.pop %v279
      %v294 = vadd.f32 %v280, 1.0
      %v295 = vadd.f32 %v281, 1.0
      %v296 = vadd.f32 %v282, 1.0
      %v297 = vadd.f32 %v283, 1.0
      %v298 = vadd.f32 %v284, 1.0
      %v299 = vadd.f32 %v285, 1.0
      %v300 = vadd.f32 %v286, 1.0
      %v301 = vadd.f32 %v287, 1.0
      %v302 = vadd.f32 %v288, 1.0
      %v303 = vadd.f32 %v289, 1.0
      %v304 = vadd.f32 %v290, 1.0
      %v305 = vadd.f32 %v291, 1.0
      %v306 = vadd.f32 %v292, 1.0
      %v307 = vadd.f32 %v293, 1.0
      %v308 = vmul.f32 %v294, 0.5
      %v309 = vmul.f32 %v295, 0.5
      %v310 = vmul.f32 %v296, 0.5
      %v311 = vmul.f32 %v297, 0.5
      %v312 = vmul.f32 %v298, 0.5
      %v313 = vmul.f32 %v299, 0.5
      %v314 = vmul.f32 %v300, 0.5
      %v315 = vmul.f32 %v301, 0.5
      %v316 = vmul.f32 %v302, 0.5
      %v317 = vmul.f32 %v303, 0.5
      %v318 = vmul.f32 %v304, 0.5
      %v319 = vmul.f32 %v305, 0.5
      %v320 = vmul.f32 %v306, 0.5
      %v321 = vmul.f32 %v307, 0.5
      %v322 = vld [vmem:[%s1 + $0x38] sm:$0xff]
      %v323 = vld [vmem:[%s1 + $0x40] sm:$0xff]
      %v324 = vld [vmem:[%s1 + $0x48] sm:$0xff]
      %v325 = vld [vmem:[%s1 + $0x50] sm:$0xff]
      %v326 = vld [vmem:[%s1 + $0x58] sm:$0xff]
      %v327 = vld [vmem:[%s1 + $0xf0] sm:$0xff]
      %v328 = vld [vmem:[%s1 + $0xf8] sm:$0xff]
      %v329 = vld [vmem:[%s1 + $0x100] sm:$0xff]
      %v330 = vld [vmem:[%s1 + $0x108] sm:$0xff]
      %v331 = vld [vmem:[%s1 + $0x110] sm:$0xff]
      %333 = vset.pattern.permute.xlu0 0
      %334 = vperm.xlu0 %333, %v327
      %v335 = vpop.permute.xlu0 %334
      %338 = vset.pattern.permute.xlu0 0
      %339 = vperm.xlu0 %338, %v328
      %v340 = vpop.permute.xlu0 %339
      %343 = vset.pattern.permute.xlu0 0
      %344 = vperm.xlu0 %343, %v329
      %v345 = vpop.permute.xlu0 %344
      %348 = vset.pattern.permute.xlu0 0
      %349 = vperm.xlu0 %348, %v330
      %v350 = vpop.permute.xlu0 %349
      %353 = vset.pattern.permute.xlu0 0
      %354 = vperm.xlu0 %353, %v331
      %v355 = vpop.permute.xlu0 %354
      %vm357 = vcmask 408576
      %v359 = vsel %vm357, %v322, 0
      %v362 = vsel %vm357, %v323, 0
      %v365 = vsel %vm357, %v324, 0
      %v368 = vsel %vm357, %v325, 0
      %v371 = vsel %vm357, %v326, 0
      %vm373 = vcmask 1041408
      %v375 = vsel %vm373, %v320, 0
      %v378 = vsel %vm373, %v321, 0
      %380 = vmatprep.subr.mxu0 %v309
      %381 = vmatpush1.msra.mxu0 %v308
      %382 = vmatprep.subr.mxu0 %v311
      %383 = vmatpush1.msra.mxu0 %v310
      %384 = vmatprep.subr.mxu0 %v313
      %385 = vmatpush1.msra.mxu0 %v312
      %386 = vmatprep.subr.mxu0 %v315
      %387 = vmatpush1.msra.mxu0 %v314
      %388 = vmatprep.subr.mxu0 %v317
      %389 = vmatpush1.msra.mxu0 %v316
      %390 = vmatprep.subr.mxu0 %v319
      %391 = vmatpush1.msra.mxu0 %v318
      %392 = vmatprep.subr.mxu0 %v378
      %393 = vmatpush1.msra.mxu0 %v375
      %394 = vmatprep.subr.mxu0 0.0
      %395 = vmatpush1.msra.mxu0 0.0
      %396 = vmatprep.subr.mxu0 0.0
      %397 = vmatpush1.msra.mxu0 0.0
      %398 = vmatprep.subr.mxu0 0.0
      %399 = vmatpush1.msra.mxu0 0.0
      %400 = vmatprep.subr.mxu0 0.0
      %401 = vmatpush1.msra.mxu0 0.0
      %402 = vmatprep.subr.mxu0 0.0
      %403 = vmatpush1.msra.mxu0 0.0
      %404 = vmatprep.subr.mxu0 0.0
      %405 = vmatpush1.msra.mxu0 0.0
      %406 = vmatprep.subr.mxu0 0.0
      %407 = vmatpush1.msra.mxu0 0.0
      %408 = vmatprep.subr.mxu0 0.0
      %409 = vmatpush1.msra.mxu0 0.0
      %410 = vmatprep.subr.mxu0 0.0
      %411 = vmatpush1.msra.mxu0 0.0
      %412 = vmatprep.subr.mxu0 0.0
      %413 = vmatpush1.msra.mxu0 0.0
      %414 = vmatprep.subr.mxu0 0.0
      %415 = vmatpush1.msra.mxu0 0.0
      %416 = vmatprep.subr.mxu0 0.0
      %417 = vmatpush1.msra.mxu0 0.0
      %418 = vmatprep.subr.mxu0 0.0
      %419 = vmatpush1.msra.mxu0 0.0
      %420 = vmatprep.subr.mxu0 0.0
      %421 = vmatpush1.msra.mxu0 0.0
      %422 = vmatprep.subr.mxu0 0.0
      %423 = vmatpush1.msra.mxu0 0.0
      %424 = vmatprep.subr.mxu0 0.0
      %425 = vmatpush1.msra.mxu0 0.0
      %426 = vmatprep.subr.mxu0 0.0
      %427 = vmatpush1.msra.mxu0 0.0
      %428 = vmatprep.subr.mxu0 0.0
      %429 = vmatpush1.msra.mxu0 0.0
      %430 = vmatprep.subr.mxu0 0.0
      %431 = vmatpush1.msra.mxu0 0.0
      %432 = vmatprep.subr.mxu0 0.0
      %433 = vmatpush1.msra.mxu0 0.0
      %434 = vmatprep.subr.mxu0 0.0
      %435 = vmatpush1.msra.mxu0 0.0
      %436 = vmatprep.subr.mxu0 0.0
      %437 = vmatpush1.msra.mxu0 0.0
      %438 = vmatprep.subr.mxu0 0.0
      %439 = vmatpush1.msra.mxu0 0.0
      %440 = vmatprep.subr.mxu0 0.0
      %441 = vmatpush1.msra.mxu0 0.0
      %442 = vmatprep.subr.mxu0 0.0
      %443 = vmatpush1.msra.mxu0 0.0
      %444 = vmatprep.mubr.f32.mxu0 0.0
      %445 = vmatmul.mubr.f32.gmra.mrb[0].mxu0 %v359
      %v446 = vpop.f32.mrb[0].mxu0
      %v447 = vadd.f32 %v335, %v446
      %v448 = vpop.f32.mrb[0].mxu0
      %v449 = vadd.f32 %v335, %v448
      %450 = vmatprep.mubr.f32.mxu0 0.0
      %451 = vmatmul.mubr.f32.gmra.mrb[0].mxu0 %v362
      %v452 = vpop.f32.mrb[0].mxu0
      %v453 = vadd.f32 %v340, %v452
      %v454 = vpop.f32.mrb[0].mxu0
      %v455 = vadd.f32 %v340, %v454
      %456 = vmatprep.mubr.f32.mxu0 0.0
      %457 = vmatmul.mubr.f32.gmra.mrb[0].mxu0 %v365
      %v458 = vpop.f32.mrb[0].mxu0
      %v459 = vadd.f32 %v345, %v458
      %v460 = vpop.f32.mrb[0].mxu0
      %v461 = vadd.f32 %v345, %v460
      %462 = vmatprep.mubr.f32.mxu0 0.0
      %463 = vmatmul.mubr.f32.gmra.mrb[0].mxu0 %v368
      %v464 = vpop.f32.mrb[0].mxu0
      %v465 = vadd.f32 %v350, %v464
      %v466 = vpop.f32.mrb[0].mxu0
      %v467 = vadd.f32 %v350, %v466
      %468 = vmatprep.mubr.f32.mxu0 0.0
      %469 = vmatmul.mubr.f32.gmra.mrb[0].mxu0 %v371
      %v470 = vpop.f32.mrb[0].mxu0
      %v471 = vadd.f32 %v355, %v470
      %v472 = vpop.f32.mrb[0].mxu0
      %v473 = vadd.f32 %v355, %v472
      %474 = vdwg.mxu0
      %v475 = vmul.f32 %v447, 0.5
      %v476 = vmul.f32 %v449, 0.5
      %v477 = vmul.f32 %v453, 0.5
      %v478 = vmul.f32 %v455, 0.5
      %v479 = vmul.f32 %v459, 0.5
      %v480 = vmul.f32 %v461, 0.5
      %v481 = vmul.f32 %v465, 0.5
      %v482 = vmul.f32 %v467, 0.5
      %v483 = vmul.f32 %v471, 0.5
      %v484 = vmul.f32 %v473, 0.5
      %v485 = vtanh.pop %v475
      %v486 = vtanh.pop %v476
      %v487 = vtanh.pop %v477
      %v488 = vtanh.pop %v478
      %v489 = vtanh.pop %v479
      %v490 = vtanh.pop %v480
      %v491 = vtanh.pop %v481
      %v492 = vtanh.pop %v482
      %v493 = vtanh.pop %v483
      %v494 = vtanh.pop %v484
      %v495 = vadd.f32 %v485, 1.0
      %v496 = vadd.f32 %v486, 1.0
      %v497 = vadd.f32 %v487, 1.0
      %v498 = vadd.f32 %v488, 1.0
      %v499 = vadd.f32 %v489, 1.0
      %v500 = vadd.f32 %v490, 1.0
      %v501 = vadd.f32 %v491, 1.0
      %v502 = vadd.f32 %v492, 1.0
      %v503 = vadd.f32 %v493, 1.0
      %v504 = vadd.f32 %v494, 1.0
      %v505 = vmul.f32 %v495, 0.5
      %v506 = vmul.f32 %v496, 0.5
      %v507 = vmul.f32 %v497, 0.5
      %v508 = vmul.f32 %v498, 0.5
      %v509 = vmul.f32 %v499, 0.5
      %v510 = vmul.f32 %v500, 0.5
      %v511 = vmul.f32 %v501, 0.5
      %v512 = vmul.f32 %v502, 0.5
      %v513 = vmul.f32 %v503, 0.5
      %v514 = vmul.f32 %v504, 0.5
      %v515 = vld [vmem:[%s1 + $0x60] sm:$0xff]
      %v516 = vld [vmem:[%s1 + $0x68] sm:$0xff]
      %v517 = vld [vmem:[%s1 + $0x70] sm:$0xff]
      %v518 = vld [vmem:[%s1 + $0x78] sm:$0x3f]
      %v519 = vld [vmem:[%s1 + $0x118] sm:$0xff]
      %v520 = vld [vmem:[%s1 + $0x120] sm:$0xff]
      %v521 = vld [vmem:[%s1 + $0x128] sm:$0xff]
      %v522 = vld [vmem:[%s1 + $0x130] sm:$0x3f]
      %524 = vset.pattern.permute.xlu0 0
      %525 = vperm.xlu0 %524, %v519
      %v526 = vpop.permute.xlu0 %525
      %529 = vset.pattern.permute.xlu0 0
      %530 = vperm.xlu0 %529, %v520
      %v531 = vpop.permute.xlu0 %530
      %534 = vset.pattern.permute.xlu0 0
      %535 = vperm.xlu0 %534, %v521
      %v536 = vpop.permute.xlu0 %535
      %539 = vset.pattern.permute.xlu0 0
      %540 = vperm.xlu0 %539, %v522
      %v541 = vpop.permute.xlu0 %540
      %vm543 = vcmask 326656
      %v545 = vsel %vm543, %v515, 0
      %v548 = vsel %vm543, %v516, 0
      %v551 = vsel %vm543, %v517, 0
      %v554 = vsel %vm543, %v518, 0
      %556 = vmatprep.subr.mxu0 %v506
      %557 = vmatpush1.msra.mxu0 %v505
      %558 = vmatprep.subr.mxu0 %v508
      %559 = vmatpush1.msra.mxu0 %v507
      %560 = vmatprep.subr.mxu0 %v510
      %561 = vmatpush1.msra.mxu0 %v509
      %562 = vmatprep.subr.mxu0 %v512
      %563 = vmatpush1.msra.mxu0 %v511
      %564 = vmatprep.subr.mxu0 %v514
      %565 = vmatpush1.msra.mxu0 %v513
      %566 = vmatprep.subr.mxu0 0.0
      %567 = vmatpush1.msra.mxu0 0.0
      %568 = vmatprep.subr.mxu0 0.0
      %569 = vmatpush1.msra.mxu0 0.0
      %570 = vmatprep.subr.mxu0 0.0
      %571 = vmatpush1.msra.mxu0 0.0
      %572 = vmatprep.subr.mxu0 0.0
      %573 = vmatpush1.msra.mxu0 0.0
      %574 = vmatprep.subr.mxu0 0.0
      %575 = vmatpush1.msra.mxu0 0.0
      %576 = vmatprep.subr.mxu0 0.0
      %577 = vmatpush1.msra.mxu0 0.0
      %578 = vmatprep.subr.mxu0 0.0
      %579 = vmatpush1.msra.mxu0 0.0
      %580 = vmatprep.subr.mxu0 0.0
      %581 = vmatpush1.msra.mxu0 0.0
      %582 = vmatprep.subr.mxu0 0.0
      %583 = vmatpush1.msra.mxu0 0.0
      %584 = vmatprep.subr.mxu0 0.0
      %585 = vmatpush1.msra.mxu0 0.0
      %586 = vmatprep.subr.mxu0 0.0
      %587 = vmatpush1.msra.mxu0 0.0
      %588 = vmatprep.subr.mxu0 0.0
      %589 = vmatpush1.msra.mxu0 0.0
      %590 = vmatprep.subr.mxu0 0.0
      %591 = vmatpush1.msra.mxu0 0.0
      %592 = vmatprep.subr.mxu0 0.0
      %593 = vmatpush1.msra.mxu0 0.0
      %594 = vmatprep.subr.mxu0 0.0
      %595 = vmatpush1.msra.mxu0 0.0
      %596 = vmatprep.subr.mxu0 0.0
      %597 = vmatpush1.msra.mxu0 0.0
      %598 = vmatprep.subr.mxu0 0.0
      %599 = vmatpush1.msra.mxu0 0.0
      %600 = vmatprep.subr.mxu0 0.0
      %601 = vmatpush1.msra.mxu0 0.0
      %602 = vmatprep.subr.mxu0 0.0
      %603 = vmatpush1.msra.mxu0 0.0
      %604 = vmatprep.subr.mxu0 0.0
      %605 = vmatpush1.msra.mxu0 0.0
      %606 = vmatprep.subr.mxu0 0.0
      %607 = vmatpush1.msra.mxu0 0.0
      %608 = vmatprep.subr.mxu0 0.0
      %609 = vmatpush1.msra.mxu0 0.0
      %610 = vmatprep.subr.mxu0 0.0
      %611 = vmatpush1.msra.mxu0 0.0
      %612 = vmatprep.subr.mxu0 0.0
      %613 = vmatpush1.msra.mxu0 0.0
      %614 = vmatprep.subr.mxu0 0.0
      %615 = vmatpush1.msra.mxu0 0.0
      %616 = vmatprep.subr.mxu0 0.0
      %617 = vmatpush1.msra.mxu0 0.0
      %618 = vmatprep.subr.mxu0 0.0
      %619 = vmatpush1.msra.mxu0 0.0
      %620 = vmatprep.mubr.f32.mxu0 0.0
      %621 = vmatmul.mubr.f32.gmra.mrb[0].mxu0 %v545
      %v622 = vpop.f32.mrb[0].mxu0
      %v623 = vadd.f32 %v526, %v622
      %v624 = vpop.f32.mrb[0].mxu0
      %v625 = vadd.f32 %v526, %v624
      %626 = vmatprep.mubr.f32.mxu0 0.0
      %627 = vmatmul.mubr.f32.gmra.mrb[0].mxu0 %v548
      %v628 = vpop.f32.mrb[0].mxu0
      %v629 = vadd.f32 %v531, %v628
      %v630 = vpop.f32.mrb[0].mxu0
      %v631 = vadd.f32 %v531, %v630
      %632 = vmatprep.mubr.f32.mxu0 0.0
      %633 = vmatmul.mubr.f32.gmra.mrb[0].mxu0 %v551
      %v634 = vpop.f32.mrb[0].mxu0
      %v635 = vadd.f32 %v536, %v634
      %v636 = vpop.f32.mrb[0].mxu0
      %v637 = vadd.f32 %v536, %v636
      %638 = vmatprep.mubr.f32.mxu0 0.0
      %639 = vmatmul.mubr.f32.gmra.mrb[0].mxu0 %v554
      %v640 = vpop.f32.mrb[0].mxu0
      %v641 = vadd.f32 %v541, %v640
      %v642 = vpop.f32.mrb[0].mxu0
      %v643 = vadd.f32 %v541, %v642
      %644 = vdwg.mxu0
      %v645 = vmul.f32 %v623, 0.5
      %v646 = vmul.f32 %v625, 0.5
      %v647 = vmul.f32 %v629, 0.5
      %v648 = vmul.f32 %v631, 0.5
      %v649 = vmul.f32 %v635, 0.5
      %v650 = vmul.f32 %v637, 0.5
      %v651 = vmul.f32 %v641, 0.5
      %v652 = vmul.f32 %v643, 0.5
      %v653 = vtanh.pop %v645
      %v654 = vtanh.pop %v646
      %v655 = vtanh.pop %v647
      %v656 = vtanh.pop %v648
      %v657 = vtanh.pop %v649
      %v658 = vtanh.pop %v650
      %v659 = vtanh.pop %v651
      %v660 = vtanh.pop %v652
      %v661 = vadd.f32 %v653, 1.0
      %v662 = vadd.f32 %v654, 1.0
      %v663 = vadd.f32 %v655, 1.0
      %v664 = vadd.f32 %v656, 1.0
      %v665 = vadd.f32 %v657, 1.0
      %v666 = vadd.f32 %v658, 1.0
      %v667 = vadd.f32 %v659, 1.0
      %v668 = vadd.f32 %v660, 1.0
      %v669 = vmul.f32 %v661, 0.5
      %v670 = vmul.f32 %v662, 0.5
      %v671 = vmul.f32 %v663, 0.5
      %v672 = vmul.f32 %v664, 0.5
      %v673 = vmul.f32 %v665, 0.5
      %v674 = vmul.f32 %v666, 0.5
      %v675 = vmul.f32 %v667, 0.5
      %v676 = vmul.f32 %v668, 0.5
      %v677 = vld [vmem:[%s1 + $0x80] sm:$0xff]
      %v678 = vld [vmem:[%s1 + $0x88] sm:$0xff]
      %v679 = vld [vmem:[%s1 + $0x90] sm:$0xf]
      %v680 = vld [vmem:[%s1 + $0x138] sm:$0xff]
      %v681 = vld [vmem:[%s1 + $0x140] sm:$0xff]
      %v682 = vld [vmem:[%s1 + $0x148] sm:$0xf]
      %684 = vset.pattern.permute.xlu0 0
      %685 = vperm.xlu0 %684, %v680
      %v686 = vpop.permute.xlu0 %685
      %689 = vset.pattern.permute.xlu0 0
      %690 = vperm.xlu0 %689, %v681
      %v691 = vpop.permute.xlu0 %690
      %694 = vset.pattern.permute.xlu0 0
      %695 = vperm.xlu0 %694, %v682
      %v696 = vpop.permute.xlu0 %695
      %vm698 = vcmask 244736
      %v700 = vsel %vm698, %v677, 0
      %v703 = vsel %vm698, %v678, 0
      %v706 = vsel %vm698, %v679, 0
      %vm708 = vcmask 1045504
      %v710 = vsel %vm708, %v675, 0
      %v713 = vsel %vm708, %v676, 0
      %715 = vmatprep.subr.mxu0 %v670
      %716 = vmatpush1.msra.mxu0 %v669
      %717 = vmatprep.subr.mxu0 %v672
      %718 = vmatpush1.msra.mxu0 %v671
      %719 = vmatprep.subr.mxu0 %v674
      %720 = vmatpush1.msra.mxu0 %v673
      %721 = vmatprep.subr.mxu0 %v713
      %722 = vmatpush1.msra.mxu0 %v710
      %723 = vmatprep.subr.mxu0 0.0
      %724 = vmatpush1.msra.mxu0 0.0
      %725 = vmatprep.subr.mxu0 0.0
      %726 = vmatpush1.msra.mxu0 0.0
      %727 = vmatprep.subr.mxu0 0.0
      %728 = vmatpush1.msra.mxu0 0.0
      %729 = vmatprep.subr.mxu0 0.0
      %730 = vmatpush1.msra.mxu0 0.0
      %731 = vmatprep.subr.mxu0 0.0
      %732 = vmatpush1.msra.mxu0 0.0
      %733 = vmatprep.subr.mxu0 0.0
      %734 = vmatpush1.msra.mxu0 0.0
      %735 = vmatprep.subr.mxu0 0.0
      %736 = vmatpush1.msra.mxu0 0.0
      %737 = vmatprep.subr.mxu0 0.0
      %738 = vmatpush1.msra.mxu0 0.0
      %739 = vmatprep.subr.mxu0 0.0
      %740 = vmatpush1.msra.mxu0 0.0
      %741 = vmatprep.subr.mxu0 0.0
      %742 = vmatpush1.msra.mxu0 0.0
      %743 = vmatprep.subr.mxu0 0.0
      %744 = vmatpush1.msra.mxu0 0.0
      %745 = vmatprep.subr.mxu0 0.0
      %746 = vmatpush1.msra.mxu0 0.0
      %747 = vmatprep.subr.mxu0 0.0
      %748 = vmatpush1.msra.mxu0 0.0
      %749 = vmatprep.subr.mxu0 0.0
      %750 = vmatpush1.msra.mxu0 0.0
      %751 = vmatprep.subr.mxu0 0.0
      %752 = vmatpush1.msra.mxu0 0.0
      %753 = vmatprep.subr.mxu0 0.0
      %754 = vmatpush1.msra.mxu0 0.0
      %755 = vmatprep.subr.mxu0 0.0
      %756 = vmatpush1.msra.mxu0 0.0
      %757 = vmatprep.subr.mxu0 0.0
      %758 = vmatpush1.msra.mxu0 0.0
      %759 = vmatprep.subr.mxu0 0.0
      %760 = vmatpush1.msra.mxu0 0.0
      %761 = vmatprep.subr.mxu0 0.0
      %762 = vmatpush1.msra.mxu0 0.0
      %763 = vmatprep.subr.mxu0 0.0
      %764 = vmatpush1.msra.mxu0 0.0
      %765 = vmatprep.subr.mxu0 0.0
      %766 = vmatpush1.msra.mxu0 0.0
      %767 = vmatprep.subr.mxu0 0.0
      %768 = vmatpush1.msra.mxu0 0.0
      %769 = vmatprep.subr.mxu0 0.0
      %770 = vmatpush1.msra.mxu0 0.0
      %771 = vmatprep.subr.mxu0 0.0
      %772 = vmatpush1.msra.mxu0 0.0
      %773 = vmatprep.subr.mxu0 0.0
      %774 = vmatpush1.msra.mxu0 0.0
      %775 = vmatprep.subr.mxu0 0.0
      %776 = vmatpush1.msra.mxu0 0.0
      %777 = vmatprep.subr.mxu0 0.0
      %778 = vmatpush1.msra.mxu0 0.0
      %779 = vmatprep.mubr.f32.mxu0 0.0
      %780 = vmatmul.mubr.f32.gmra.mrb[0].mxu0 %v700
      %v781 = vpop.f32.mrb[0].mxu0
      %v782 = vadd.f32 %v686, %v781
      %v783 = vpop.f32.mrb[0].mxu0
      %v784 = vadd.f32 %v686, %v783
      %785 = vmatprep.mubr.f32.mxu0 0.0
      %786 = vmatmul.mubr.f32.gmra.mrb[0].mxu0 %v703
      %v787 = vpop.f32.mrb[0].mxu0
      %v788 = vadd.f32 %v691, %v787
      %v789 = vpop.f32.mrb[0].mxu0
      %v790 = vadd.f32 %v691, %v789
      %791 = vmatprep.mubr.f32.mxu0 0.0
      %792 = vmatmul.mubr.f32.gmra.mrb[0].mxu0 %v706
      %v793 = vpop.f32.mrb[0].mxu0
      %v794 = vadd.f32 %v696, %v793
      %v795 = vpop.f32.mrb[0].mxu0
      %v796 = vadd.f32 %v696, %v795
      %797 = vdwg.mxu0
      %v798 = vmul.f32 %v782, 0.5
      %v799 = vmul.f32 %v784, 0.5
      %v800 = vmul.f32 %v788, 0.5
      %v801 = vmul.f32 %v790, 0.5
      %v802 = vmul.f32 %v794, 0.5
      %v803 = vmul.f32 %v796, 0.5
      %v804 = vtanh.pop %v798
      %v805 = vtanh.pop %v799
      %v806 = vtanh.pop %v800
      %v807 = vtanh.pop %v801
      %v808 = vtanh.pop %v802
      %v809 = vtanh.pop %v803
      %v810 = vadd.f32 %v804, 1.0
      %v811 = vadd.f32 %v805, 1.0
      %v812 = vadd.f32 %v806, 1.0
      %v813 = vadd.f32 %v807, 1.0
      %v814 = vadd.f32 %v808, 1.0
      %v815 = vadd.f32 %v809, 1.0
      %v816 = vmul.f32 %v810, 0.5
      %v817 = vmul.f32 %v811, 0.5
      %v818 = vmul.f32 %v812, 0.5
      %v819 = vmul.f32 %v813, 0.5
      %v820 = vmul.f32 %v814, 0.5
      %v821 = vmul.f32 %v815, 0.5
      %v822 = vld [vmem:[%s1 + $0x98] sm:$0xff]
      %v823 = vld [vmem:[%s1 + $0xa0] sm:$0x3]
      %v824 = vld [vmem:[%s1 + $0x150] sm:$0xff]
      %v825 = vld [vmem:[%s1 + $0x158] sm:$0x3]
      %827 = vset.pattern.permute.xlu0 0
      %828 = vperm.xlu0 %827, %v824
      %v829 = vpop.permute.xlu0 %828
      %832 = vset.pattern.permute.xlu0 0
      %833 = vperm.xlu0 %832, %v825
      %v834 = vpop.permute.xlu0 %833
      %vm836 = vcmask 162816
      %v838 = vsel %vm836, %v822, 0
      %v841 = vsel %vm836, %v823, 0
      %vm843 = vcmask 1043456
      %v845 = vsel %vm843, %v820, 0
      %v848 = vsel %vm843, %v821, 0
      %850 = vmatprep.subr.mxu0 %v817
      %851 = vmatpush1.msra.mxu0 %v816
      %852 = vmatprep.subr.mxu0 %v819
      %853 = vmatpush1.msra.mxu0 %v818
      %854 = vmatprep.subr.mxu0 %v848
      %855 = vmatpush1.msra.mxu0 %v845
      %856 = vmatprep.subr.mxu0 0.0
      %857 = vmatpush1.msra.mxu0 0.0
      %858 = vmatprep.subr.mxu0 0.0
      %859 = vmatpush1.msra.mxu0 0.0
      %860 = vmatprep.subr.mxu0 0.0
      %861 = vmatpush1.msra.mxu0 0.0
      %862 = vmatprep.subr.mxu0 0.0
      %863 = vmatpush1.msra.mxu0 0.0
      %864 = vmatprep.subr.mxu0 0.0
      %865 = vmatpush1.msra.mxu0 0.0
      %866 = vmatprep.subr.mxu0 0.0
      %867 = vmatpush1.msra.mxu0 0.0
      %868 = vmatprep.subr.mxu0 0.0
      %869 = vmatpush1.msra.mxu0 0.0
      %870 = vmatprep.subr.mxu0 0.0
      %871 = vmatpush1.msra.mxu0 0.0
      %872 = vmatprep.subr.mxu0 0.0
      %873 = vmatpush1.msra.mxu0 0.0
      %874 = vmatprep.subr.mxu0 0.0
      %875 = vmatpush1.msra.mxu0 0.0
      %876 = vmatprep.subr.mxu0 0.0
      %877 = vmatpush1.msra.mxu0 0.0
      %878 = vmatprep.subr.mxu0 0.0
      %879 = vmatpush1.msra.mxu0 0.0
      %880 = vmatprep.subr.mxu0 0.0
      %881 = vmatpush1.msra.mxu0 0.0
      %882 = vmatprep.subr.mxu0 0.0
      %883 = vmatpush1.msra.mxu0 0.0
      %884 = vmatprep.subr.mxu0 0.0
      %885 = vmatpush1.msra.mxu0 0.0
      %886 = vmatprep.subr.mxu0 0.0
      %887 = vmatpush1.msra.mxu0 0.0
      %888 = vmatprep.subr.mxu0 0.0
      %889 = vmatpush1.msra.mxu0 0.0
      %890 = vmatprep.subr.mxu0 0.0
      %891 = vmatpush1.msra.mxu0 0.0
      %892 = vmatprep.subr.mxu0 0.0
      %893 = vmatpush1.msra.mxu0 0.0
      %894 = vmatprep.subr.mxu0 0.0
      %895 = vmatpush1.msra.mxu0 0.0
      %896 = vmatprep.subr.mxu0 0.0
      %897 = vmatpush1.msra.mxu0 0.0
      %898 = vmatprep.subr.mxu0 0.0
      %899 = vmatpush1.msra.mxu0 0.0
      %900 = vmatprep.subr.mxu0 0.0
      %901 = vmatpush1.msra.mxu0 0.0
      %902 = vmatprep.subr.mxu0 0.0
      %903 = vmatpush1.msra.mxu0 0.0
      %904 = vmatprep.subr.mxu0 0.0
      %905 = vmatpush1.msra.mxu0 0.0
      %906 = vmatprep.subr.mxu0 0.0
      %907 = vmatpush1.msra.mxu0 0.0
      %908 = vmatprep.subr.mxu0 0.0
      %909 = vmatpush1.msra.mxu0 0.0
      %910 = vmatprep.subr.mxu0 0.0
      %911 = vmatpush1.msra.mxu0 0.0
      %912 = vmatprep.subr.mxu0 0.0
      %913 = vmatpush1.msra.mxu0 0.0
      %914 = vmatprep.mubr.f32.mxu0 0.0
      %915 = vmatmul.mubr.f32.gmra.mrb[0].mxu0 %v838
      %v916 = vpop.f32.mrb[0].mxu0
      %v917 = vadd.f32 %v829, %v916
      %v918 = vpop.f32.mrb[0].mxu0
      %v919 = vadd.f32 %v829, %v918
      %920 = vmatprep.mubr.f32.mxu0 0.0
      %921 = vmatmul.mubr.f32.gmra.mrb[0].mxu0 %v841
      %v922 = vpop.f32.mrb[0].mxu0
      %v923 = vadd.f32 %v834, %v922
      %v924 = vpop.f32.mrb[0].mxu0
      %v925 = vadd.f32 %v834, %v924
      %926 = vdwg.mxu0
      %v927 = vmul.f32 %v917, 0.5
      %v928 = vmul.f32 %v919, 0.5
      %v929 = vmul.f32 %v923, 0.5
      %v930 = vmul.f32 %v925, 0.5
      %v931 = vtanh.pop %v927
      %v932 = vtanh.pop %v928
      %v933 = vtanh.pop %v929
      %v934 = vtanh.pop %v930
      %v935 = vadd.f32 %v931, 1.0
      %v936 = vadd.f32 %v932, 1.0
      %v937 = vadd.f32 %v933, 1.0
      %v938 = vadd.f32 %v934, 1.0
      %v939 = vmul.f32 %v935, 0.5
      %v940 = vmul.f32 %v936, 0.5
      %v941 = vmul.f32 %v937, 0.5
      %v942 = vmul.f32 %v938, 0.5
      %v943 = vld [vmem:[%s1 + $0xa8] sm:$0xff]
      %v944 = vld [vmem:[%s1 + $0xb0] sm:$0x3]
      %v945 = vld [vmem:[%s1 + $0x160] sm:$0x1]
      %947 = vset.pattern.permute.xlu0 0
      %948 = vperm.xlu0 %947, %v943
      %v949 = vpop.permute.xlu0 %948
      %952 = vset.pattern.permute.xlu0 0
      %953 = vperm.xlu0 %952, %v944
      %v954 = vpop.permute.xlu0 %953
      %v956 = vmul.f32 %v949, %v939
      %v957 = vmul.f32 %v949, %v940
      %v958 = vmul.f32 %v954, %v941
      %v959 = vmul.f32 %v954, %v942
      %v960 = vsel %vm373, %v958, 0.0
      %v961 = vadd.f32 %v956, %v960
      %v962 = vrot.slane %v961, 4
      %v963 = vadd.f32 %v961, %v962
      %v964 = vrot.slane %v963, 2
      %v965 = vadd.f32 %v963, %v964
      %v966 = vrot.slane %v965, 1
      %v967 = vadd.f32 %v965, %v966
      %v968 = vsel %vm373, %v959, 0.0
      %v969 = vadd.f32 %v957, %v968
      %v970 = vrot.slane %v969, 4
      %v971 = vadd.f32 %v969, %v970
      %v972 = vrot.slane %v971, 2
      %v973 = vadd.f32 %v971, %v972
      %v974 = vrot.slane %v973, 1
      %v975 = vadd.f32 %v973, %v974
      %977 = vset.pattern.permute.xlu0 0
      %978 = vperm.xlu0 %977, %v945
      %v979 = vpop.permute.xlu0 %978
      %v981 = vadd.f32 %v967, %v979
      %v982 = vadd.f32 %v975, %v979
      %v985 = vcombine.low %v981, %v982
      %v987 = vunpack.c.l.s4 1966171168
      %v988 = vunpack.c.0.s8 %v987
      %v989 = vlaneseq
      %v990 = vshrl.u32 %v989, 7
      %v991 = vsub.s32 %v988, %v990
      %v992 = vrot.slane %v985, %v991
      %v994 = vunpack.c.l.s4 1966171168
      %v995 = vunpack.c.0.s8 %v994
      %v996 = vlaneseq
      %v997 = vshrl.u32 %v996, 7
      %v998 = vsub.s32 %v995, %v997
      %v999 = vrot.slane %v992, %v998
      %v1001 = vlaneseq
      %vm1002 = vcmp.ge.s32.totalorder %v1001, 0
      %vm1003 = vcmp.lt.s32.totalorder %v1001, 256
      %vm1004 = vmand %vm1002, %vm1003
      %1005 = vst.msk [vmem:[%s140] sm:$0x3] %vm1004, %v999
      %s1006 = smul.u32 2, %s13
      %p1007 = scmp.lt.s32.totalorder %s1006, 3
      %s1008 = scalar_select %p1007, %s1006, 3
      %s1009 = scalar_lea.vmem %s2, %s1008
      // Predicated region
      $region29: #{pinn_forward.1} parent=27 // pred_check
        %p1010 = pneg %p78
      $region30: #{pinn_forward.1} parent=27 // pred_check_branch
        %1012 = sbr.rel (%p1010) target = $region32
      $region31: #{pinn_forward.1} parent=27 // pred_region
        %s1013 = smul.u32 2, %s13
      $region32: #{pinn_forward.1} parent=27 // pred_fallthru
        _
    $region28: #{pinn_forward.1} parent=5 // pred_fallthru
      _
    %p1014 = scmp.le.s32.totalorder 2, %s8
    // Predicated region
    $region33: #{pinn_forward.1} parent=5 // pred_check
      %p1015 = pneg %p1014
    $region34: #{pinn_forward.1} parent=5 // pred_check_branch
      %1017 = sbr.rel (%p1015) target = $region36
    $region35: #{pinn_forward.1} parent=5 // pred_region
      %s1018 = ssub.s32 %s8, 2
      // Predicated region
      $region37: #{pinn_forward.1} parent=35 // pred_check
        %p1019 = pneg %p84
      $region38: #{pinn_forward.1} parent=35 // pred_check_branch
        %1021 = sbr.rel (%p1019) target = $region40
      $region39: #{pinn_forward.1} parent=35 // pred_region
        %s1022 = smul.u32 2, %s14
        %p1023 = scmp.lt.s32.totalorder %s1022, 3
        %s1024 = scalar_select %p1023, %s1022, 3
        %s1025 = scalar_lea.vmem %s2, %s1024
      $region40: #{pinn_forward.1} parent=35 // pred_fallthru
        _
    $region36: #{pinn_forward.1} parent=5 // pred_fallthru
      _
  $region6: #{pinn_forward.1} parent=0 // loop_footer
    %s12 = sadd.s32 1, %s8
  $region7: #{pinn_forward.1} parent=0 // loop_footer_branch
    %7 = sbr.rel target = $region3
  $region8: #{pinn_forward.1} parent=0 // loop_exit
    _

</llo_original>
